<compile_context>
chip_gen: v7x
topology: tpu7x:2x2x1
jax: 0.10.0
libtpu: 0.0.40
codegen_flags: <defaults>
</compile_context>

<pallas_src>
import jax
import jax.numpy as jnp
import numpy as np
from jax.experimental import pallas as pl
from jax.experimental.pallas import tpu as pltpu

NEG_SLOPE = 0.01  # torch nn.LeakyReLU default negative_slope


def _lrelu(v):
    # mul + max (2 VALU ops) instead of cmp + mul + select (3).
    return jnp.maximum(v, NEG_SLOPE * v)


def _mm(a, b):
    # Native MXU form: contraction on (lane of A, sublane of B).
    return jnp.dot(a, b, preferred_element_type=jnp.float32)


def hybridnet_kernel(x_ref, hwt_ref, sw1t_ref, sb1_ref, sw2t_ref, sb2_ref,
                     out_ref):
    # SWNet(func.linear(x, hw, None)):
    #   y = x @ hw.T == x @ hwT         (hwT precomputed in the wrapper)
    y = _lrelu(_mm(x_ref[...], hwt_ref[...]))           # (TB, size1)  LReLU0
    y = _lrelu(_mm(y, sw1t_ref[...]) + sb1_ref[...])    # (TB, size2)  Linear1 + LReLU1
    y = _lrelu(_mm(y, sw2t_ref[...]) + sb2_ref[...])    # (TB, size3)  Linear2 + LReLU2
    out_ref[...] = y.astype(out_ref.dtype)


def _const_spec(a):
    nd = a.ndim
    return pl.BlockSpec(a.shape, lambda i, _nd=nd: (0,) * _nd)


def _round_down(x, m):
    return (x // m) * m


def _pick_tb(batch):
    # Target the largest tile (<= 8192 rows, ~2.9 MiB of f32[89] x per buffer)
    # that still leaves >= 2 grid steps when the batch permits, so v7x's two
    # TensorCores both get work and DMA/compute can pipeline.
    if batch < 16:
        return 8
    cap = max(8, _round_down(batch // 2, 8))
    for tb in (8192, 4096, 2048, 1024, 512, 256, 128, 64, 32, 16, 8):
        if tb <= cap:
            return tb
    return 8


def hybridnet_forward(params, data_input):
    thick, theta, fw0, fb0, fw1, fb1, sw1, sb1, sw2, sb2 = params
    B, in_dim = data_input.shape            # in_dim == 89 in the torch module
    size1 = theta.shape[1]
    out_dim = sw2.shape[0]

    # ---- Parameter-only fnet branch, hoisted out of the kernel (one tiny XLA
    # op per call instead of once per grid step). Produces hwT == hw.T so the
    # in-kernel matmul is x @ hwT with no runtime transpose. ----
    dp = theta.T * thick                                 # (size1, tf_layers)
    h = _lrelu(dp @ fw0.T + fb0)                         # (size1, fnet_hid)
    hw = (h @ fw1.T + fb1)[:, :in_dim]                   # (size1, 89)
    hwT = jnp.asarray(hw.T, jnp.float32)                 # (89, size1)

    # Pre-oriented SWNet weights (layout plumbing, free at trace time).
    sw1t = jnp.asarray(sw1.T, jnp.float32)               # (size1, size2)
    sw2t = jnp.asarray(sw2.T, jnp.float32)               # (size2, size3)
    sb1_row = jnp.asarray(sb1.reshape(1, -1), jnp.float32)
    sb2_row = jnp.asarray(sb2.reshape(1, -1), jnp.float32)

    # ---- Batch tiling with wrapper-side zero padding (no giant-block cliff).
    tb = _pick_tb(B)
    Bp = ((B + tb - 1) // tb) * tb
    x = jnp.asarray(data_input, jnp.float32)
    if Bp != B:
        x = jnp.pad(x, ((0, Bp - B), (0, 0)))
    grid = (Bp // tb,)

    consts = (hwT, sw1t, sb1_row, sw2t, sb2_row)
    size2 = sw1.shape[0]

    weight_bytes = 4 * int(hwT.size + sw1t.size + sb1_row.size
                           + sw2t.size + sb2_row.size)
    cost = pl.CostEstimate(
        flops=2 * Bp * (in_dim * size1 + size1 * size2 + size2 * out_dim),
        transcendentals=0,
        bytes_accessed=Bp * (in_dim + out_dim) * 4 + weight_bytes,
    )

    in_specs = ([pl.BlockSpec((tb, in_dim), lambda i: (i, 0))]
                + [_const_spec(a) for a in consts])

    out = pl.pallas_call(
        hybridnet_kernel,
        out_shape=jax.ShapeDtypeStruct((Bp, out_dim), jnp.float32),
        grid=grid,
        in_specs=in_specs,
        out_specs=pl.BlockSpec((tb, out_dim), lambda i: (i, 0)),
        compiler_params=pltpu.CompilerParams(
            dimension_semantics=("parallel",)),
        cost_estimate=cost,
    )(x, *consts)

    return out[:B] if Bp != B else out


def reference_forward(params, data_input):
    # Pure-JAX reference mirroring the torch forward (weights == [] branch).
    thick, theta, fw0, fb0, fw1, fb1, sw1, sb1, sw2, sb2 = params
    dp = theta.T * thick                                   # (size1, tf_layers)
    h = _lrelu(dp @ fw0.T + fb0)
    hw = (h @ fw1.T + fb1)[:, :data_input.shape[1]]        # (size1, 89)
    y = _lrelu(data_input @ hw.T)                          # LReLU0
    y = _lrelu(y @ sw1.T + sb1)                            # Linear1 + LReLU1
    y = _lrelu(y @ sw2.T + sb2)                            # Linear2 + LReLU2
    return y


if __name__ == "__main__":
    # Small, forward-consistent shapes.
    TF_LAYERS = 8                  # fnet input width (= thick width)
    SIZE = (89, 32, 64, 16)        # size[0]=89 input feat, size[1]=#filters, ...
    FNET_HID = 64
    FNET_OUT = 96                  # >= 89 so [:, :89] is a real slice
    BATCH = 4

    thick_min, thick_max = 1.0, 5.0
    theta_min, theta_max = 0.1, 1.0

    key = jax.random.PRNGKey(0)
    ks = jax.random.split(key, 13)

    # Design parameters (torch: nn.Parameter from uniform rand).
    thick = jax.random.uniform(ks[0], (1, TF_LAYERS), jnp.float32,
                               minval=thick_min, maxval=thick_max)
    theta = jax.random.uniform(ks[1], (1, SIZE[1]), jnp.float32,
                               minval=theta_min, maxval=theta_max)

    # Synthetic frozen fnet: Linear(8->64) -> LeakyReLU -> Linear(64->96).
    fw0 = 0.1 * jax.random.normal(ks[2], (FNET_HID, TF_LAYERS), jnp.float32)
    fb0 = 0.01 * jax.random.normal(ks[3], (FNET_HID,), jnp.float32)
    fw1 = 0.1 * jax.random.normal(ks[4], (FNET_OUT, FNET_HID), jnp.float32)
    fb1 = 0.01 * jax.random.normal(ks[5], (FNET_OUT,), jnp.float32)

    # SWNet: Linear(size[1]->size[2]), Linear(size[2]->size[3]).
    sw1 = jax.random.normal(ks[6], (SIZE[2], SIZE[1]), jnp.float32) / jnp.sqrt(SIZE[1])
    sb1 = 0.01 * jax.random.normal(ks[7], (SIZE[2],), jnp.float32)
    sw2 = jax.random.normal(ks[8], (SIZE[3], SIZE[2]), jnp.float32) / jnp.sqrt(SIZE[2])
    sb2 = 0.01 * jax.random.normal(ks[9], (SIZE[3],), jnp.float32)

    params = (thick, theta, fw0, fb0, fw1, fb1, sw1, sb1, sw2, sb2)

    # Case 1: tiny batch (padded to one 8-row tile, single grid step).
    data_small = jax.random.normal(ks[10], (BATCH, SIZE[0]), jnp.float32)
    out_small = jax.block_until_ready(hybridnet_forward(params, data_small))
    ref_small = jax.block_until_ready(reference_forward(params, data_small))
    np.testing.assert_allclose(np.asarray(out_small), np.asarray(ref_small),
                               rtol=1e-5, atol=1e-5)

    # Case 2: larger batch exercises the multi-step, pipelined batch grid
    # (tb capped at B//2 -> grid=(2,), both v7x cores busy).
    data_big = jax.random.normal(ks[11], (256, SIZE[0]), jnp.float32)
    out_big = jax.block_until_ready(hybridnet_forward(params, data_big))
    ref_big = jax.block_until_ready(reference_forward(params, data_big))
    np.testing.assert_allclose(np.asarray(out_big), np.asarray(ref_big),
                               rtol=1e-5, atol=1e-5)

    # Case 3: batch not divisible by 8 exercises the zero-pad + slice path.
    data_odd = jax.random.normal(ks[12], (37, SIZE[0]), jnp.float32)
    out_odd = jax.block_until_ready(hybridnet_forward(params, data_odd))
    ref_odd = jax.block_until_ready(reference_forward(params, data_odd))
    np.testing.assert_allclose(np.asarray(out_odd), np.asarray(ref_odd),
                               rtol=1e-5, atol=1e-5)

    print("KERNEL_OK")
</pallas_src>

<mosaic_0001>
module attributes {stable_mosaic.version = 11 : i64} {
  func.func @hybridnet_kernel(%arg0: i32, %arg1: memref<8x89xf32, #tpu.memory_space<vmem>>, %arg2: memref<89x32xf32, #tpu.memory_space<vmem>>, %arg3: memref<32x64xf32, #tpu.memory_space<vmem>>, %arg4: memref<1x64xf32, #tpu.memory_space<vmem>>, %arg5: memref<64x16xf32, #tpu.memory_space<vmem>>, %arg6: memref<1x16xf32, #tpu.memory_space<vmem>>, %arg7: memref<8x16xf32, #tpu.memory_space<vmem>>) attributes {dimension_semantics = [#tpu.dimension_semantics<parallel>], iteration_bounds = array<i64: 1>, scalar_prefetch = 0 : i64, scratch_operands = 0 : i64, tpu.core_type = #tpu.core_type<tc>, window_params = [{transform_indices = @transform_0, window_bounds = array<i64: 8, 89>}, {pipeline_mode = #tpu.pipeline_mode<synchronous>, transform_indices = @transform_1, window_bounds = array<i64: 89, 32>}, {pipeline_mode = #tpu.pipeline_mode<synchronous>, transform_indices = @transform_2, window_bounds = array<i64: 32, 64>}, {pipeline_mode = #tpu.pipeline_mode<synchronous>, transform_indices = @transform_3, window_bounds = array<i64: 1, 64>}, {pipeline_mode = #tpu.pipeline_mode<synchronous>, transform_indices = @transform_4, window_bounds = array<i64: 64, 16>}, {pipeline_mode = #tpu.pipeline_mode<synchronous>, transform_indices = @transform_5, window_bounds = array<i64: 1, 16>}, {transform_indices = @transform_6, window_bounds = array<i64: 8, 16>}]} {
    %c0 = arith.constant 0 : index
    %c0_0 = arith.constant 0 : index
    %0 = vector.load %arg1[%c0, %c0_0] : memref<8x89xf32, #tpu.memory_space<vmem>>, vector<8x89xf32>
    %c0_1 = arith.constant 0 : index
    %c0_2 = arith.constant 0 : index
    %1 = vector.load %arg2[%c0_1, %c0_2] : memref<89x32xf32, #tpu.memory_space<vmem>>, vector<89x32xf32>
    %cst = arith.constant dense<0.000000e+00> : vector<8x32xf32>
    %2 = tpu.matmul %0, %1, %cst {dimension_numbers = #tpu.dot_dimension_numbers<[1], [0], [0], [1], [0, 0, 1, 1], [], []>} : vector<8x89xf32>, vector<89x32xf32>, vector<8x32xf32> -> vector<8x32xf32>
    %cst_3 = arith.constant 0.00999999977 : f32
    %3 = vector.broadcast %cst_3 : f32 to vector<8x32xf32>
    %4 = arith.mulf %3, %2 : vector<8x32xf32>
    %5 = arith.maximumf %2, %4 : vector<8x32xf32>
    %c0_4 = arith.constant 0 : index
    %c0_5 = arith.constant 0 : index
    %6 = vector.load %arg3[%c0_4, %c0_5] : memref<32x64xf32, #tpu.memory_space<vmem>>, vector<32x64xf32>
    %cst_6 = arith.constant dense<0.000000e+00> : vector<8x64xf32>
    %7 = tpu.matmul %5, %6, %cst_6 {dimension_numbers = #tpu.dot_dimension_numbers<[1], [0], [0], [1], [0, 0, 1, 1], [], []>} : vector<8x32xf32>, vector<32x64xf32>, vector<8x64xf32> -> vector<8x64xf32>
    %c0_7 = arith.constant 0 : index
    %c0_8 = arith.constant 0 : index
    %8 = vector.load %arg4[%c0_7, %c0_8] : memref<1x64xf32, #tpu.memory_space<vmem>>, vector<1x64xf32>
    %9 = vector.broadcast %8 : vector<1x64xf32> to vector<8x64xf32>
    %10 = arith.addf %7, %9 : vector<8x64xf32>
    %cst_9 = arith.constant 0.00999999977 : f32
    %11 = vector.broadcast %cst_9 : f32 to vector<8x64xf32>
    %12 = arith.mulf %11, %10 : vector<8x64xf32>
    %13 = arith.maximumf %10, %12 : vector<8x64xf32>
    %c0_10 = arith.constant 0 : index
    %c0_11 = arith.constant 0 : index
    %14 = vector.load %arg5[%c0_10, %c0_11] : memref<64x16xf32, #tpu.memory_space<vmem>>, vector<64x16xf32>
    %cst_12 = arith.constant dense<0.000000e+00> : vector<8x16xf32>
    %15 = tpu.matmul %13, %14, %cst_12 {dimension_numbers = #tpu.dot_dimension_numbers<[1], [0], [0], [1], [0, 0, 1, 1], [], []>} : vector<8x64xf32>, vector<64x16xf32>, vector<8x16xf32> -> vector<8x16xf32>
    %c0_13 = arith.constant 0 : index
    %c0_14 = arith.constant 0 : index
    %16 = vector.load %arg6[%c0_13, %c0_14] : memref<1x16xf32, #tpu.memory_space<vmem>>, vector<1x16xf32>
    %17 = vector.broadcast %16 : vector<1x16xf32> to vector<8x16xf32>
    %18 = arith.addf %15, %17 : vector<8x16xf32>
    %cst_15 = arith.constant 0.00999999977 : f32
    %19 = vector.broadcast %cst_15 : f32 to vector<8x16xf32>
    %20 = arith.mulf %19, %18 : vector<8x16xf32>
    %21 = arith.maximumf %18, %20 : vector<8x16xf32>
    %c0_16 = arith.constant 0 : index
    %c0_17 = arith.constant 0 : index
    %22 = vector.load %arg7[%c0_16, %c0_17] : memref<8x16xf32, #tpu.memory_space<vmem>>, vector<8x16xf32>
    tpu.vector_store %arg7[%c0_16, %c0_17], %21 {strides = array<i32>} : memref<8x16xf32, #tpu.memory_space<vmem>>, vector<8x16xf32>,
    return
  }
  func.func @transform_0(%arg0: i32) -> (i32, i32) {
    %c0_i32 = arith.constant 0 : i32
    %c0_i32_0 = arith.constant 0 : i32
    return %arg0, %c0_i32 : i32, i32
  }
  func.func @transform_1(%arg0: i32) -> (i32, i32) {
    %c0_i32 = arith.constant 0 : i32
    %c0_i32_0 = arith.constant 0 : i32
    %c0_i32_1 = arith.constant 0 : i32
    return %c0_i32, %c0_i32_0 : i32, i32
  }
  func.func @transform_2(%arg0: i32) -> (i32, i32) {
    %c0_i32 = arith.constant 0 : i32
    %c0_i32_0 = arith.constant 0 : i32
    %c0_i32_1 = arith.constant 0 : i32
    return %c0_i32, %c0_i32_0 : i32, i32
  }
  func.func @transform_3(%arg0: i32) -> (i32, i32) {
    %c0_i32 = arith.constant 0 : i32
    %c0_i32_0 = arith.constant 0 : i32
    %c0_i32_1 = arith.constant 0 : i32
    return %c0_i32, %c0_i32_0 : i32, i32
  }
  func.func @transform_4(%arg0: i32) -> (i32, i32) {
    %c0_i32 = arith.constant 0 : i32
    %c0_i32_0 = arith.constant 0 : i32
    %c0_i32_1 = arith.constant 0 : i32
    return %c0_i32, %c0_i32_0 : i32, i32
  }
  func.func @transform_5(%arg0: i32) -> (i32, i32) {
    %c0_i32 = arith.constant 0 : i32
    %c0_i32_0 = arith.constant 0 : i32
    %c0_i32_1 = arith.constant 0 : i32
    return %c0_i32, %c0_i32_0 : i32, i32
  }
  func.func @transform_6(%arg0: i32) -> (i32, i32) {
    %c0_i32 = arith.constant 0 : i32
    %c0_i32_0 = arith.constant 0 : i32
    return %arg0, %c0_i32 : i32, i32
  }
}

</mosaic_0001>

<llo_original>
// kernel: tpu_custom_call.1
$region0: #{tpu_custom_call.1}
  #allocation0 [shape = 'u32[]', space=smem, size = 0x4, offset = 0x4, fixed_abs, tag = 'smem constant byte address 0x4 - core index']
  #allocation1 [shape = 'u32[144,128]{1,0:T(1,128)}', space=vmem, size = 0x12000, scoped, tag = 'internal scratch']
  %s0 = inlined_call_operand.vmem [shape: f32[8,89], index: 0, kind: input, shape index: {}]
  %s1 = inlined_call_operand.vmem [shape: f32[89,32], index: 1, kind: input, shape index: {}]
  %s2 = inlined_call_operand.vmem [shape: f32[32,64], index: 2, kind: input, shape index: {}]
  %s3 = inlined_call_operand.vmem [shape: f32[1,64], index: 3, kind: input, shape index: {}]
  %s4 = inlined_call_operand.vmem [shape: f32[64,16], index: 4, kind: input, shape index: {}]
  %s5 = inlined_call_operand.vmem [shape: f32[1,16], index: 5, kind: input, shape index: {}]
  %s6 = inlined_call_operand.hbm [shape: f32[8,16], index: 6, kind: output, shape index: {}]
  %s7 = sld [smem:[#allocation0]]
  $region34: #{tpu_custom_call.1} parent=0
    _
  %s9 = ssub.s32 1, %s7
  %s10 = scalar_select 0, %s9, %s7
  $region1: #{tpu_custom_call.1} parent=0
    #allocation2 [shape = 'u8[4096]{0}', space=vmem, size = 0x1000, scoped, tag = 'output window, operand 0, single buffered']
    #allocation3 [shape = 's32[1]{0}', space=sflag, size = 0x4, scoped, tag = 'scoped memory for tpu_custom_call.1']
    %11 = vsyncpa [#allocation3], 0
    // Predicated region
    $region2: #{tpu_custom_call.1} parent=1 // pred_check
      _
    $region3: #{tpu_custom_call.1} parent=1 // pred_check_branch
      %13 = sbr.rel (0) target = $region5
    $region4: #{tpu_custom_call.1} parent=1 // pred_region
      _
    $region5: #{tpu_custom_call.1} parent=1 // pred_fallthru
      _
    // Predicated region
    $region6: #{tpu_custom_call.1} parent=1 // pred_check
      _
    $region7: #{tpu_custom_call.1} parent=1 // pred_check_branch
      %15 = sbr.rel (0) target = $region9
    $region8: #{tpu_custom_call.1} parent=1 // pred_region
      _
    $region9: #{tpu_custom_call.1} parent=1 // pred_fallthru
      _
    // Predicated region
    $region10: #{tpu_custom_call.1} parent=1 // pred_check
      _
    $region11: #{tpu_custom_call.1} parent=1 // pred_check_branch
      %17 = sbr.rel (0) target = $region13
    $region12: #{tpu_custom_call.1} parent=1 // pred_region
      _
    $region13: #{tpu_custom_call.1} parent=1 // pred_fallthru
      _
    // Predicated region
    $region14: #{tpu_custom_call.1} parent=1 // pred_check
      _
    $region15: #{tpu_custom_call.1} parent=1 // pred_check_branch
      %19 = sbr.rel (0) target = $region17
    $region16: #{tpu_custom_call.1} parent=1 // pred_region
      _
    $region17: #{tpu_custom_call.1} parent=1 // pred_fallthru
      _
    // Predicated region
    $region18: #{tpu_custom_call.1} parent=1 // pred_check
      _
    $region19: #{tpu_custom_call.1} parent=1 // pred_check_branch
      %21 = sbr.rel (0) target = $region21
    $region20: #{tpu_custom_call.1} parent=1 // pred_region
      _
    $region21: #{tpu_custom_call.1} parent=1 // pred_fallthru
      _
    // Predicated region
    $region22: #{tpu_custom_call.1} parent=1 // pred_check
      _
    $region23: #{tpu_custom_call.1} parent=1 // pred_check_branch
      %23 = sbr.rel (0) target = $region25
    $region24: #{tpu_custom_call.1} parent=1 // pred_region
      _
    $region25: #{tpu_custom_call.1} parent=1 // pred_fallthru
      _
    %v24 = vld [vmem:[%s0] sm:$0xff]
    %v25 = vld [vmem:[%s1] sm:$0xff]
    %v26 = vld [vmem:[%s1 + $0x8] sm:$0xff]
    %v27 = vld [vmem:[%s1 + $0x10] sm:$0xff]
    %v28 = vld [vmem:[%s1 + $0x18] sm:$0xff]
    %v29 = vld [vmem:[%s1 + $0x20] sm:$0xff]
    %v30 = vld [vmem:[%s1 + $0x28] sm:$0xff]
    %v31 = vld [vmem:[%s1 + $0x30] sm:$0xff]
    %v32 = vld [vmem:[%s1 + $0x38] sm:$0xff]
    %v33 = vld [vmem:[%s1 + $0x40] sm:$0xff]
    %v34 = vld [vmem:[%s1 + $0x48] sm:$0xff]
    %v35 = vld [vmem:[%s1 + $0x50] sm:$0xff]
    %v36 = vld [vmem:[%s1 + $0x58] sm:$0x1]
    %vm37 = vcmask 728064
    %v39 = vsel %vm37, %v24, 0
    %vm41 = vcmask 1040384
    %v43 = vsel %vm41, %v36, 0
    %45 = vmatprep.subr.mxu0 0.0
    %46 = vmatpush1.msra.mxu0 %v25
    %47 = vmatprep.subr.mxu0 0.0
    %48 = vmatpush1.msra.mxu0 %v26
    %49 = vmatprep.subr.mxu0 0.0
    %50 = vmatpush1.msra.mxu0 %v27
    %51 = vmatprep.subr.mxu0 0.0
    %52 = vmatpush1.msra.mxu0 %v28
    %53 = vmatprep.subr.mxu0 0.0
    %54 = vmatpush1.msra.mxu0 %v29
    %55 = vmatprep.subr.mxu0 0.0
    %56 = vmatpush1.msra.mxu0 %v30
    %57 = vmatprep.subr.mxu0 0.0
    %58 = vmatpush1.msra.mxu0 %v31
    %59 = vmatprep.subr.mxu0 0.0
    %60 = vmatpush1.msra.mxu0 %v32
    %61 = vmatprep.subr.mxu0 0.0
    %62 = vmatpush1.msra.mxu0 %v33
    %63 = vmatprep.subr.mxu0 0.0
    %64 = vmatpush1.msra.mxu0 %v34
    %65 = vmatprep.subr.mxu0 0.0
    %66 = vmatpush1.msra.mxu0 %v35
    %67 = vmatprep.subr.mxu0 0.0
    %68 = vmatpush1.msra.mxu0 %v43
    %69 = vmatprep.subr.mxu0 0.0
    %70 = vmatpush1.msra.mxu0 0.0
    %71 = vmatprep.subr.mxu0 0.0
    %72 = vmatpush1.msra.mxu0 0.0
    %73 = vmatprep.subr.mxu0 0.0
    %74 = vmatpush1.msra.mxu0 0.0
    %75 = vmatprep.subr.mxu0 0.0
    %76 = vmatpush1.msra.mxu0 0.0
    %77 = vmatprep.subr.mxu0 0.0
    %78 = vmatpush1.msra.mxu0 0.0
    %79 = vmatprep.subr.mxu0 0.0
    %80 = vmatpush1.msra.mxu0 0.0
    %81 = vmatprep.subr.mxu0 0.0
    %82 = vmatpush1.msra.mxu0 0.0
    %83 = vmatprep.subr.mxu0 0.0
    %84 = vmatpush1.msra.mxu0 0.0
    %85 = vmatprep.subr.mxu0 0.0
    %86 = vmatpush1.msra.mxu0 0.0
    %87 = vmatprep.subr.mxu0 0.0
    %88 = vmatpush1.msra.mxu0 0.0
    %89 = vmatprep.subr.mxu0 0.0
    %90 = vmatpush1.msra.mxu0 0.0
    %91 = vmatprep.subr.mxu0 0.0
    %92 = vmatpush1.msra.mxu0 0.0
    %93 = vmatprep.subr.mxu0 0.0
    %94 = vmatpush1.msra.mxu0 0.0
    %95 = vmatprep.subr.mxu0 0.0
    %96 = vmatpush1.msra.mxu0 0.0
    %97 = vmatprep.subr.mxu0 0.0
    %98 = vmatpush1.msra.mxu0 0.0
    %99 = vmatprep.subr.mxu0 0.0
    %100 = vmatpush1.msra.mxu0 0.0
    %101 = vmatprep.subr.mxu0 0.0
    %102 = vmatpush1.msra.mxu0 0.0
    %103 = vmatprep.subr.mxu0 0.0
    %104 = vmatpush1.msra.mxu0 0.0
    %105 = vmatprep.subr.mxu0 0.0
    %106 = vmatpush1.msra.mxu0 0.0
    %107 = vmatprep.subr.mxu0 0.0
    %108 = vmatpush1.msra.mxu0 0.0
    %109 = vmatprep.mubr.f32.mxu0 0.0
    %110 = vmatmul.mubr.f32.gmra.mrb[0].mxu0 %v39
    %v111 = vpop.f32.mrb[0].mxu0
    %v112 = vadd.f32 0.0, %v111
    %v113 = vpop.f32.mrb[0].mxu0
    %114 = vdwg.mxu0
    %v115 = vmul.f32 %v112, 0.01
    %v116 = vmax.f32 %v112, %v115
    %v117 = vld [vmem:[%s2] sm:$0xff]
    %v118 = vld [vmem:[%s2 + $0x8] sm:$0xff]
    %v119 = vld [vmem:[%s2 + $0x10] sm:$0xff]
    %v120 = vld [vmem:[%s2 + $0x18] sm:$0xff]
    %v121 = vld [vmem:[%s3] sm:$0x1]
    %v123 = vlaneseq
    %v124 = vshrl.u32 %v123, 7
    %v125 = vsub.s32 0, %v124
    %v126 = vrot.slane %v121, %v125
    %vm128 = vcmask 261120
    %v130 = vsel %vm128, %v116, 0
    %132 = vmatprep.subr.mxu0 0.0
    %133 = vmatpush1.msra.mxu0 %v117
    %134 = vmatprep.subr.mxu0 0.0
    %135 = vmatpush1.msra.mxu0 %v118
    %136 = vmatprep.subr.mxu0 0.0
    %137 = vmatpush1.msra.mxu0 %v119
    %138 = vmatprep.subr.mxu0 0.0
    %139 = vmatpush1.msra.mxu0 %v120
    %140 = vmatprep.subr.mxu0 0.0
    %141 = vmatpush1.msra.mxu0 0.0
    %142 = vmatprep.subr.mxu0 0.0
    %143 = vmatpush1.msra.mxu0 0.0
    %144 = vmatprep.subr.mxu0 0.0
    %145 = vmatpush1.msra.mxu0 0.0
    %146 = vmatprep.subr.mxu0 0.0
    %147 = vmatpush1.msra.mxu0 0.0
    %148 = vmatprep.subr.mxu0 0.0
    %149 = vmatpush1.msra.mxu0 0.0
    %150 = vmatprep.subr.mxu0 0.0
    %151 = vmatpush1.msra.mxu0 0.0
    %152 = vmatprep.subr.mxu0 0.0
    %153 = vmatpush1.msra.mxu0 0.0
    %154 = vmatprep.subr.mxu0 0.0
    %155 = vmatpush1.msra.mxu0 0.0
    %156 = vmatprep.subr.mxu0 0.0
    %157 = vmatpush1.msra.mxu0 0.0
    %158 = vmatprep.subr.mxu0 0.0
    %159 = vmatpush1.msra.mxu0 0.0
    %160 = vmatprep.subr.mxu0 0.0
    %161 = vmatpush1.msra.mxu0 0.0
    %162 = vmatprep.subr.mxu0 0.0
    %163 = vmatpush1.msra.mxu0 0.0
    %164 = vmatprep.subr.mxu0 0.0
    %165 = vmatpush1.msra.mxu0 0.0
    %166 = vmatprep.subr.mxu0 0.0
    %167 = vmatpush1.msra.mxu0 0.0
    %168 = vmatprep.subr.mxu0 0.0
    %169 = vmatpush1.msra.mxu0 0.0
    %170 = vmatprep.subr.mxu0 0.0
    %171 = vmatpush1.msra.mxu0 0.0
    %172 = vmatprep.subr.mxu0 0.0
    %173 = vmatpush1.msra.mxu0 0.0
    %174 = vmatprep.subr.mxu0 0.0
    %175 = vmatpush1.msra.mxu0 0.0
    %176 = vmatprep.subr.mxu0 0.0
    %177 = vmatpush1.msra.mxu0 0.0
    %178 = vmatprep.subr.mxu0 0.0
    %179 = vmatpush1.msra.mxu0 0.0
    %180 = vmatprep.subr.mxu0 0.0
    %181 = vmatpush1.msra.mxu0 0.0
    %182 = vmatprep.subr.mxu0 0.0
    %183 = vmatpush1.msra.mxu0 0.0
    %184 = vmatprep.subr.mxu0 0.0
    %185 = vmatpush1.msra.mxu0 0.0
    %186 = vmatprep.subr.mxu0 0.0
    %187 = vmatpush1.msra.mxu0 0.0
    %188 = vmatprep.subr.mxu0 0.0
    %189 = vmatpush1.msra.mxu0 0.0
    %190 = vmatprep.subr.mxu0 0.0
    %191 = vmatpush1.msra.mxu0 0.0
    %192 = vmatprep.subr.mxu0 0.0
    %193 = vmatpush1.msra.mxu0 0.0
    %194 = vmatprep.subr.mxu0 0.0
    %195 = vmatpush1.msra.mxu0 0.0
    %196 = vmatprep.mubr.f32.mxu0 0.0
    %197 = vmatmul.mubr.f32.gmra.mrb[0].mxu0 %v130
    %v198 = vpop.f32.mrb[0].mxu0
    %v199 = vadd.f32 %v126, %v198
    %v200 = vpop.f32.mrb[0].mxu0
    %201 = vdwg.mxu0
    %v202 = vmul.f32 %v199, 0.01
    %v203 = vmax.f32 %v199, %v202
    %v204 = vld [vmem:[%s4] sm:$0xff]
    %v205 = vld [vmem:[%s4 + $0x8] sm:$0xff]
    %v206 = vld [vmem:[%s4 + $0x10] sm:$0xff]
    %v207 = vld [vmem:[%s4 + $0x18] sm:$0xff]
    %v208 = vld [vmem:[%s4 + $0x20] sm:$0xff]
    %v209 = vld [vmem:[%s4 + $0x28] sm:$0xff]
    %v210 = vld [vmem:[%s4 + $0x30] sm:$0xff]
    %v211 = vld [vmem:[%s4 + $0x38] sm:$0xff]
    %v212 = vld [vmem:[%s5] sm:$0x1]
    %v214 = vlaneseq
    %v215 = vshrl.u32 %v214, 7
    %v216 = vsub.s32 0, %v215
    %v217 = vrot.slane %v212, %v216
    %vm219 = vcmask 523264
    %v221 = vsel %vm219, %v203, 0
    %223 = vmatprep.subr.mxu0 0.0
    %224 = vmatpush1.msra.mxu0 %v204
    %225 = vmatprep.subr.mxu0 0.0
    %226 = vmatpush1.msra.mxu0 %v205
    %227 = vmatprep.subr.mxu0 0.0
    %228 = vmatpush1.msra.mxu0 %v206
    %229 = vmatprep.subr.mxu0 0.0
    %230 = vmatpush1.msra.mxu0 %v207
    %231 = vmatprep.subr.mxu0 0.0
    %232 = vmatpush1.msra.mxu0 %v208
    %233 = vmatprep.subr.mxu0 0.0
    %234 = vmatpush1.msra.mxu0 %v209
    %235 = vmatprep.subr.mxu0 0.0
    %236 = vmatpush1.msra.mxu0 %v210
    %237 = vmatprep.subr.mxu0 0.0
    %238 = vmatpush1.msra.mxu0 %v211
    %239 = vmatprep.subr.mxu0 0.0
    %240 = vmatpush1.msra.mxu0 0.0
    %241 = vmatprep.subr.mxu0 0.0
    %242 = vmatpush1.msra.mxu0 0.0
    %243 = vmatprep.subr.mxu0 0.0
    %244 = vmatpush1.msra.mxu0 0.0
    %245 = vmatprep.subr.mxu0 0.0
    %246 = vmatpush1.msra.mxu0 0.0
    %247 = vmatprep.subr.mxu0 0.0
    %248 = vmatpush1.msra.mxu0 0.0
    %249 = vmatprep.subr.mxu0 0.0
    %250 = vmatpush1.msra.mxu0 0.0
    %251 = vmatprep.subr.mxu0 0.0
    %252 = vmatpush1.msra.mxu0 0.0
    %253 = vmatprep.subr.mxu0 0.0
    %254 = vmatpush1.msra.mxu0 0.0
    %255 = vmatprep.subr.mxu0 0.0
    %256 = vmatpush1.msra.mxu0 0.0
    %257 = vmatprep.subr.mxu0 0.0
    %258 = vmatpush1.msra.mxu0 0.0
    %259 = vmatprep.subr.mxu0 0.0
    %260 = vmatpush1.msra.mxu0 0.0
    %261 = vmatprep.subr.mxu0 0.0
    %262 = vmatpush1.msra.mxu0 0.0
    %263 = vmatprep.subr.mxu0 0.0
    %264 = vmatpush1.msra.mxu0 0.0
    %265 = vmatprep.subr.mxu0 0.0
    %266 = vmatpush1.msra.mxu0 0.0
    %267 = vmatprep.subr.mxu0 0.0
    %268 = vmatpush1.msra.mxu0 0.0
    %269 = vmatprep.subr.mxu0 0.0
    %270 = vmatpush1.msra.mxu0 0.0
    %271 = vmatprep.subr.mxu0 0.0
    %272 = vmatpush1.msra.mxu0 0.0
    %273 = vmatprep.subr.mxu0 0.0
    %274 = vmatpush1.msra.mxu0 0.0
    %275 = vmatprep.subr.mxu0 0.0
    %276 = vmatpush1.msra.mxu0 0.0
    %277 = vmatprep.subr.mxu0 0.0
    %278 = vmatpush1.msra.mxu0 0.0
    %279 = vmatprep.subr.mxu0 0.0
    %280 = vmatpush1.msra.mxu0 0.0
    %281 = vmatprep.subr.mxu0 0.0
    %282 = vmatpush1.msra.mxu0 0.0
    %283 = vmatprep.subr.mxu0 0.0
    %284 = vmatpush1.msra.mxu0 0.0
    %285 = vmatprep.subr.mxu0 0.0
    %286 = vmatpush1.msra.mxu0 0.0
    %287 = vmatprep.mubr.f32.mxu0 0.0
    %288 = vmatmul.mubr.f32.gmra.mrb[0].mxu0 %v221
    %v289 = vpop.f32.mrb[0].mxu0
    %v290 = vadd.f32 %v217, %v289
    %v291 = vpop.f32.mrb[0].mxu0
    %292 = vdwg.mxu0
    %v293 = vmul.f32 %v290, 0.01
    %v294 = vmax.f32 %v290, %v293
    %vm295 = vcmask 130048
    %296 = vst.msk [vmem:[#allocation2] sm:$0xff] %vm295, %v294
    // Predicated region
    $region26: #{tpu_custom_call.1} parent=1 // pred_check
      _
    $region27: #{tpu_custom_call.1} parent=1 // pred_check_branch
      %298 = sbr.rel (0) target = $region29
    $region28: #{tpu_custom_call.1} parent=1 // pred_region
      %s300 = ssub.s32 128, 128
      %301 = vsyncadd [#allocation3], %s300
      %s303 = sshll.u32 [#allocation2], 4
      %s304 = int_to_ptr.vmem [resolvable:$true] %s303
      %306 = dma.vmem_to_hbm [thread:$0]  %s304, 128, %s6, [#allocation3]
    $region29: #{tpu_custom_call.1} parent=1 // pred_fallthru
      _
    // Predicated region
    $region30: #{tpu_custom_call.1} parent=1 // pred_check
      _
    $region31: #{tpu_custom_call.1} parent=1 // pred_check_branch
      %308 = sbr.rel (0) target = $region33
    $region32: #{tpu_custom_call.1} parent=1 // pred_region
      %309 = dma.done [#allocation3], 128
    $region33: #{tpu_custom_call.1} parent=1 // pred_fallthru
      _
    %310 = vsyncpa [#allocation3], 1

</llo_original>
